<compile_context>
chip_gen: v7x
topology: tpu7x:2x2x1
jax: 0.10.0
libtpu: 0.0.40
codegen_flags: <defaults>
</compile_context>

<pallas_src>
import functools
import numpy as np
import jax
import jax.numpy as jnp
from jax import random
from jax.experimental import pallas as pl
from jax.experimental.pallas import tpu as pltpu


# ----------------------------- Pallas kernels ------------------------------

def _mapping_kernel(noise_ref, wt_ref, b_ref, out_ref):
    # PixelNorm over the feature dim, then 8 WSLinear layers (ReLU between).
    x = noise_ref[...]                                               # (N, Z)
    x = x * jax.lax.rsqrt(jnp.mean(x * x, axis=1, keepdims=True) + 1e-8)
    n_layers = wt_ref.shape[0]
    for l in range(n_layers):
        h = jnp.dot(x, wt_ref[l], preferred_element_type=jnp.float32)
        h = h + b_ref[pl.ds(l, 1), :]                                # (N, H)
        x = jnp.maximum(h, 0.0) if l < n_layers - 1 else h
    out_ref[...] = x


def _linear_kernel(x_ref, w_ref, b_ref, out_ref):
    # y = x @ (scale * W^T) + b   (plain WSLinear / 1x1 WSConv2d)
    out_ref[...] = (jnp.dot(x_ref[...], w_ref[...],
                            preferred_element_type=jnp.float32) + b_ref[...])


_NON_CENTER_TAPS = (0, 1, 2, 3, 5, 6, 7, 8)   # 3x3 taps row-major, center skipped


def _block_kernel(x_ref, wv_ref, sw_ref, sb_ref, shift_ref,
                  w1_ref, b1_ref, nw1_ref, n1_ref,
                  w2_ref, b2_ref, nw2_ref, n2_ref, out_ref):
    """One full StyleGANGeneratorBlock for one sample, fully fused in VMEM."""
    HW = x_ref.shape[1]
    C = out_ref.shape[2]
    inv_hw = 1.0 / float(HW)

    # --- all four AdaIN style projections as a single 4C-lane matmul ---
    style = (jnp.dot(wv_ref[0], sw_ref[...],
                     preferred_element_type=jnp.float32) + sb_ref[...])  # (1, 4C)
    ss1, sh1 = style[:, 0 * C:1 * C], style[:, 1 * C:2 * C]
    ss2, sh2 = style[:, 2 * C:3 * C], style[:, 3 * C:4 * C]

    def conv3x3(x_flat, w_all):
        # one lane-dense matmul computes all 9 taps at once ...
        y = jnp.dot(x_flat, w_all, preferred_element_type=jnp.float32)   # (HW, 9C)
        out = y[:, 4 * C:5 * C]                      # center tap needs no shift
        # ... plus 8 small zero-padded spatial-shift matmuls (zero padding=1)
        for idx, t in enumerate(_NON_CENTER_TAPS):
            out = out + jnp.dot(shift_ref[idx], y[:, t * C:(t + 1) * C],
                                preferred_element_type=jnp.float32)
        return out                                                       # (HW, C)

    def finish(raw, bias, nweight, noise, ss, sh):
        # conv bias + InjectNoise + LeakyReLU(0.2) + InstanceNorm2d + AdaIN
        a = raw + bias + noise * nweight
        a = jnp.where(a >= 0.0, a, 0.2 * a)
        mu = jnp.sum(a, axis=0, keepdims=True) * inv_hw                  # (1, C)
        ex2 = jnp.sum(a * a, axis=0, keepdims=True) * inv_hw
        an = (a - mu) * jax.lax.rsqrt(ex2 - mu * mu + 1e-5)
        return ss * an + sh

    # stage 1: conv1 (+noise1/lrelu/IN/AdaIN), intermediate stays in VMEM
    h1 = finish(conv3x3(x_ref[0], w1_ref[...]),
                b1_ref[...], nw1_ref[...], n1_ref[0], ss1, sh1)
    # stage 2: conv2 directly on the VMEM-resident h1
    out_ref[0] = finish(conv3x3(h1, w2_ref[...]),
                        b2_ref[...], nw2_ref[...], n2_ref[0], ss2, sh2)


def _upsample_kernel(x_ref, kh_ref, kw_ref, out_ref):
    # separable bilinear 2x upsample (align_corners=True): rows then columns
    u = jnp.dot(kh_ref[...], x_ref[0], preferred_element_type=jnp.float32)
    out_ref[0] = jnp.dot(kw_ref[...], u, preferred_element_type=jnp.float32)


def _rgb_fade_kernel(gen_ref, ups_ref, wg_ref, bg_ref, wu_ref, bu_ref,
                     alpha_ref, out_ref):
    # fused: rgb(generated), rgb(upscaled), tanh fade-in
    a = alpha_ref[0, 0]
    g = jnp.dot(gen_ref[...], wg_ref[...],
                preferred_element_type=jnp.float32) + bg_ref[...]
    u = jnp.dot(ups_ref[...], wu_ref[...],
                preferred_element_type=jnp.float32) + bu_ref[...]
    out_ref[...] = jnp.tanh(a * g + (1.0 - a) * u)


# ------------------------------ kernel wrappers -----------------------------

def mapping_forward(noise, map_wt, map_b):
    n, _ = noise.shape
    w_dim = map_wt.shape[2]
    return pl.pallas_call(
        _mapping_kernel,
        out_shape=jax.ShapeDtypeStruct((n, w_dim), jnp.float32),
    )(noise, map_wt, map_b)


@functools.lru_cache(maxsize=None)
def _conv_shift_matrices(h, w):
    # (8, HW, HW) zero-padded shift matrices for the 8 non-center 3x3 taps.
    mats = []
    for ky in range(3):
        for kx in range(3):
            if ky == 1 and kx == 1:
                continue
            dy, dx = ky - 1, kx - 1
            s = np.zeros((h * w, h * w), np.float32)
            for oy in range(h):
                for ox in range(w):
                    iy, ix = oy + dy, ox + dx
                    if 0 <= iy < h and 0 <= ix < w:
                        s[oy * w + ox, iy * w + ix] = 1.0
            mats.append(s)
    return np.stack(mats)


def block_forward(x_flat, w, bp, noise_key):
    """One fused pallas_call for a whole StyleGANGeneratorBlock."""
    n, wdim = w.shape
    nx, hw, cin = x_flat.shape
    cout = bp['b1'].shape[-1]
    side = int(round(hw ** 0.5))
    k1, k2 = random.split(noise_key)
    # torch InjectNoise: noise batch == conv output batch (1 for the initial
    # constant -> shared across samples, n for progressive blocks).
    noise1 = random.normal(k1, (nx, hw, 1), jnp.float32)
    noise2 = random.normal(k2, (n, hw, 1), jnp.float32)
    shifts = jnp.asarray(_conv_shift_matrices(side, side))
    w3 = w.reshape(n, 1, wdim)

    bmap = (lambda i: (i, 0, 0)) if nx > 1 else (lambda i: (0, 0, 0))
    return pl.pallas_call(
        _block_kernel,
        grid=(n,),
        in_specs=[
            pl.BlockSpec((1, hw, cin), bmap),                        # x
            pl.BlockSpec((1, 1, wdim), lambda i: (i, 0, 0)),         # w vector
            pl.BlockSpec((wdim, 4 * cout), lambda i: (0, 0)),        # style W
            pl.BlockSpec((1, 4 * cout), lambda i: (0, 0)),           # style b
            pl.BlockSpec((8, hw, hw), lambda i: (0, 0, 0)),          # tap shifts
            pl.BlockSpec((cin, 9 * cout), lambda i: (0, 0)),         # conv1 W
            pl.BlockSpec((1, cout), lambda i: (0, 0)),               # conv1 b
            pl.BlockSpec((1, cout), lambda i: (0, 0)),               # noise1 w
            pl.BlockSpec((1, hw, 1), bmap),                          # noise1
            pl.BlockSpec((cout, 9 * cout), lambda i: (0, 0)),        # conv2 W
            pl.BlockSpec((1, cout), lambda i: (0, 0)),               # conv2 b
            pl.BlockSpec((1, cout), lambda i: (0, 0)),               # noise2 w
            pl.BlockSpec((1, hw, 1), lambda i: (i, 0, 0)),           # noise2
        ],
        out_specs=pl.BlockSpec((1, hw, cout), lambda i: (i, 0, 0)),
        out_shape=jax.ShapeDtypeStruct((n, hw, cout), jnp.float32),
        compiler_params=pltpu.CompilerParams(
            dimension_semantics=("parallel",)),
    )(x_flat, w3, bp['style_w'], bp['style_b'], shifts,
      bp['w1'], bp['b1'], bp['nw1'], noise1,
      bp['w2'], bp['b2'], bp['nw2'], noise2)


def upsample_forward(x_flat, up_mats):
    n, hw, c = x_flat.shape
    kh_np, kw_np = up_mats
    hw2 = kw_np.shape[0]
    kh = jnp.asarray(kh_np)
    kw = jnp.asarray(kw_np)
    return pl.pallas_call(
        _upsample_kernel,
        grid=(n,),
        in_specs=[pl.BlockSpec((1, hw, c), lambda i: (i, 0, 0)),
                  pl.BlockSpec(kh_np.shape, lambda i: (0, 0)),
                  pl.BlockSpec(kw_np.shape, lambda i: (0, 0))],
        out_specs=pl.BlockSpec((1, hw2, c), lambda i: (i, 0, 0)),
        out_shape=jax.ShapeDtypeStruct((n, hw2, c), jnp.float32),
        compiler_params=pltpu.CompilerParams(
            dimension_semantics=("parallel",)),
    )(x_flat, kh, kw)


def rgb_fade_forward(gen_flat, ups_flat, rgb_gen, rgb_ups, alpha):
    n, hw, c = gen_flat.shape
    side = int(round(hw ** 0.5))
    img_ch = rgb_gen[0].shape[1]
    a = jnp.full((1, 1), alpha, jnp.float32)
    out = pl.pallas_call(
        _rgb_fade_kernel,
        in_specs=[pl.BlockSpec(memory_space=pltpu.MemorySpace.VMEM)] * 6
        + [pl.BlockSpec(memory_space=pltpu.MemorySpace.SMEM)],
        out_specs=pl.BlockSpec(memory_space=pltpu.MemorySpace.VMEM),
        out_shape=jax.ShapeDtypeStruct((n * hw, img_ch), jnp.float32),
    )(gen_flat.reshape(n * hw, c), ups_flat.reshape(n * hw, c),
      rgb_gen[0], rgb_gen[1], rgb_ups[0], rgb_ups[1], a)
    return out.reshape(n, side, side, img_ch)


def rgb_forward(x_flat, rgb_params):
    # layer-0 path: initial_rgb only (no fade, no tanh in the torch module)
    n, hw, c = x_flat.shape
    side = int(round(hw ** 0.5))
    wmat, b = rgb_params
    y = pl.pallas_call(
        _linear_kernel,
        out_shape=jax.ShapeDtypeStruct((n * hw, wmat.shape[1]), jnp.float32),
    )(x_flat.reshape(n * hw, c), wmat, b)
    return y.reshape(n, side, side, wmat.shape[1])


# ------------------------------- glue helpers -------------------------------

def bilinear_matrix(h_in, h_out):
    # align_corners=True bilinear interpolation matrix (h_out, h_in)
    a = np.zeros((h_out, h_in), np.float32)
    scale = (h_in - 1) / (h_out - 1)
    for i in range(h_out):
        src = i * scale
        i0 = int(np.floor(src))
        f = src - i0
        if i0 >= h_in - 1:
            i0, f = h_in - 1, 0.0
        a[i, i0] += 1.0 - f
        if f > 0.0:
            a[i, i0 + 1] += f
    return a


def upsample_matrices(h_in, h_out):
    # separable kron factors acting on the flat (H*W, C) slab (square spatial)
    a = bilinear_matrix(h_in, h_out)                               # (h_out, h_in)
    kh = np.kron(a, np.eye(h_in)).astype(np.float32)               # (h_out*h_in, h_in^2)
    kw = np.kron(np.eye(h_out), a).astype(np.float32)              # (h_out^2, h_out*h_in)
    return kh, kw


# ----------------------------- parameter builders ---------------------------

def make_wslinear_mat(key, fin, fout):
    w = random.normal(key, (fout, fin), jnp.float32)      # nn.init.normal_
    return w.T * (2.0 / fin) ** 0.5                        # (fin, fout), bias = 0


def make_wsconv3x3_taps(key, cin, cout):
    # torch (Cout, Cin, 3, 3) weight -> (Cin, 9*Cout), taps (ky,kx) stacked
    # along the lane axis (tap-major, Cout-minor), WS scale folded in.
    w = random.normal(key, (cout, cin, 3, 3), jnp.float32)
    scale = (2.0 / (cin * 9)) ** 0.5
    return jnp.transpose(w, (1, 2, 3, 0)).reshape(cin, 9 * cout) * scale


def make_wsconv1x1(key, cin, cout):
    w = random.normal(key, (cout, cin, 1, 1), jnp.float32)
    scale = (2.0 / cin) ** 0.5
    return w.reshape(cout, cin).T * scale, jnp.zeros((1, cout), jnp.float32)


def make_mapping_params(key, z_dim, hidden, w_dim):
    assert z_dim == hidden == w_dim, \
        "torch Sequential wiring (and stacked weights) require equal dims here"
    dims = [(z_dim, hidden), (hidden, hidden), (z_dim, hidden), (hidden, hidden),
            (hidden, hidden), (hidden, hidden), (hidden, hidden), (hidden, w_dim)]
    ks = random.split(key, len(dims))
    wts = [make_wslinear_mat(k, fi, fo) for k, (fi, fo) in zip(ks, dims)]
    bs = [jnp.zeros((fo,), jnp.float32) for (_, fo) in dims]
    return jnp.stack(wts), jnp.stack(bs)


def make_block_params(key, cin, cout, w_dim):
    assert cin == cout, "torch block wiring (conv2 in_chan) requires in_chan == out_chan"
    ks = random.split(key, 8)
    style_w = jnp.concatenate([make_wslinear_mat(ks[4], w_dim, cout),   # a1 scale
                               make_wslinear_mat(ks[5], w_dim, cout),   # a1 shift
                               make_wslinear_mat(ks[6], w_dim, cout),   # a2 scale
                               make_wslinear_mat(ks[7], w_dim, cout)],  # a2 shift
                              axis=1)                                   # (w_dim, 4C)
    return dict(
        w1=make_wsconv3x3_taps(ks[0], cin, cout),
        w2=make_wsconv3x3_taps(ks[1], cout, cout),
        b1=jnp.zeros((1, cout), jnp.float32),
        b2=jnp.zeros((1, cout), jnp.float32),
        nw1=random.normal(ks[2], (1, cout), jnp.float32),   # InjectNoise weight
        nw2=random.normal(ks[3], (1, cout), jnp.float32),
        style_w=style_w,
        style_b=jnp.zeros((1, 4 * cout), jnp.float32),
    )


def make_generator_params(key, z_dim, map_hidden, w_dim, in_chan, hidden_chan,
                          img_channels, num_steps):
    k_map, k_init, k_rgb0, k_prog = random.split(key, 4)
    map_wt, map_b = make_mapping_params(k_map, z_dim, map_hidden, w_dim)
    const = jnp.ones((1, 4 * 4, in_chan), jnp.float32)          # starting_constant (flat)
    init_block = make_block_params(k_init, in_chan, hidden_chan, w_dim)
    rgb = [make_wsconv1x1(k_rgb0, in_chan, img_channels)]
    prog = []
    kp = k_prog
    for _ in range(num_steps):
        kp, kb, kr = random.split(kp, 3)
        prog.append(make_block_params(kb, hidden_chan, hidden_chan, w_dim))
        rgb.append(make_wsconv1x1(kr, hidden_chan, img_channels))
    up_mats, res = [], 4
    for _ in range(num_steps):
        up_mats.append(upsample_matrices(res, 2 * res))          # numpy, separable
        res *= 2
    return dict(map_wt=map_wt, map_b=map_b, const=const, init_block=init_block,
                prog_blocks=prog, rgb=rgb, up_mats=up_mats)


# ------------------------------- model forward ------------------------------

def stylegan_forward(params, noise, alpha, current_layer, noise_key):
    w = mapping_forward(noise, params['map_wt'], params['map_b'])        # (N, w_dim)
    k_init, k_prog = random.split(noise_key)
    x = block_forward(params['const'], w, params['init_block'], k_init)  # (N, 16, C)

    if current_layer == 0:
        rgb = rgb_forward(x, params['rgb'][0])
        return jnp.transpose(rgb, (0, 3, 1, 2))                          # NCHW

    upscaled = None
    for layer in range(current_layer):
        upscaled = upsample_forward(x, params['up_mats'][layer])
        x = block_forward(upscaled, w, params['prog_blocks'][layer],
                          random.fold_in(k_prog, layer))

    out = rgb_fade_forward(x, upscaled,
                           params['rgb'][current_layer],
                           params['rgb'][current_layer - 1], alpha)      # tanh fade
    return jnp.transpose(out, (0, 3, 1, 2))                              # NCHW


# ------------------------------------ main -----------------------------------

if __name__ == "__main__":
    Z_DIM = MAP_HIDDEN = W_DIM = 32       # torch wiring requires z_dim == hidden_dim
    IN_CHAN = HIDDEN_CHAN = 32            # torch block wiring requires in_chan == hidden_chan
    IMG_CH = 3
    NUM_STEPS = 1                         # 4x4 -> 8x8
    N = 2
    ALPHA = 0.5
    CURRENT_LAYER = 1

    key = random.PRNGKey(0)
    k_param, k_noise_in, k_inject = random.split(key, 3)
    params = make_generator_params(k_param, Z_DIM, MAP_HIDDEN, W_DIM,
                                   IN_CHAN, HIDDEN_CHAN, IMG_CH, NUM_STEPS)
    noise = random.normal(k_noise_in, (N, Z_DIM), jnp.float32)

    out = stylegan_forward(params, noise, ALPHA, CURRENT_LAYER, k_inject)
    out = jax.block_until_ready(out)
    assert out.shape == (N, IMG_CH, 8, 8) and out.dtype == jnp.float32
    assert bool(jnp.all(jnp.isfinite(out)))
    print("KERNEL_OK")
</pallas_src>

<mosaic_0001>
module attributes {stable_mosaic.version = 11 : i64} {
  func.func @_mapping_kernel(%arg0: memref<2x32xf32, #tpu.memory_space<vmem>>, %arg1: memref<8x32x32xf32, #tpu.memory_space<vmem>>, %arg2: memref<8x32xf32, #tpu.memory_space<vmem>>, %arg3: memref<2x32xf32, #tpu.memory_space<vmem>>) attributes {dimension_semantics = [], scalar_prefetch = 0 : i64, scratch_operands = 0 : i64, tpu.core_type = #tpu.core_type<tc>} {
    %c0 = arith.constant 0 : index
    %c0_0 = arith.constant 0 : index
    %0 = vector.load %arg0[%c0, %c0_0] : memref<2x32xf32, #tpu.memory_space<vmem>>, vector<2x32xf32>
    %1 = arith.mulf %0, %0 : vector<2x32xf32>
    %cst = arith.constant dense<0.000000e+00> : vector<2xf32>
    %2 = vector.multi_reduction <add>, %1, %cst [1] : vector<2x32xf32> to vector<2xf32>
    %3 = vector.shape_cast %2 : vector<2xf32> to vector<2x1xf32>
    %cst_1 = arith.constant 3.200000e+01 : f32
    %4 = vector.broadcast %cst_1 : f32 to vector<2x1xf32>
    %5 = arith.divf %3, %4 : vector<2x1xf32>
    %cst_2 = arith.constant 9.99999993E-9 : f32
    %6 = vector.broadcast %cst_2 : f32 to vector<2x1xf32>
    %7 = arith.addf %5, %6 : vector<2x1xf32>
    %8 = math.rsqrt %7 : vector<2x1xf32>
    %9 = vector.broadcast %8 : vector<2x1xf32> to vector<2x32xf32>
    %10 = arith.mulf %0, %9 : vector<2x32xf32>
    %c0_3 = arith.constant 0 : index
    %c0_4 = arith.constant 0 : index
    %c0_5 = arith.constant 0 : index
    %11 = vector.load %arg1[%c0_3, %c0_4, %c0_5] : memref<8x32x32xf32, #tpu.memory_space<vmem>>, vector<1x32x32xf32>
    %12 = vector.shape_cast %11 : vector<1x32x32xf32> to vector<32x32xf32>
    %cst_6 = arith.constant dense<0.000000e+00> : vector<2x32xf32>
    %13 = tpu.matmul %10, %12, %cst_6 {dimension_numbers = #tpu.dot_dimension_numbers<[1], [0], [0], [1], [0, 0, 1, 1], [], []>} : vector<2x32xf32>, vector<32x32xf32>, vector<2x32xf32> -> vector<2x32xf32>
    %c0_7 = arith.constant 0 : index
    %c0_8 = arith.constant 0 : index
    %14 = vector.load %arg2[%c0_7, %c0_8] : memref<8x32xf32, #tpu.memory_space<vmem>>, vector<1x32xf32>
    %15 = vector.broadcast %14 : vector<1x32xf32> to vector<2x32xf32>
    %16 = arith.addf %13, %15 : vector<2x32xf32>
    %cst_9 = arith.constant 0.000000e+00 : f32
    %17 = vector.broadcast %cst_9 : f32 to vector<2x32xf32>
    %18 = arith.maximumf %16, %17 : vector<2x32xf32>
    %c1 = arith.constant 1 : index
    %c0_10 = arith.constant 0 : index
    %c0_11 = arith.constant 0 : index
    %19 = vector.load %arg1[%c1, %c0_10, %c0_11] : memref<8x32x32xf32, #tpu.memory_space<vmem>>, vector<1x32x32xf32>
    %20 = vector.shape_cast %19 : vector<1x32x32xf32> to vector<32x32xf32>
    %cst_12 = arith.constant dense<0.000000e+00> : vector<2x32xf32>
    %21 = tpu.matmul %18, %20, %cst_12 {dimension_numbers = #tpu.dot_dimension_numbers<[1], [0], [0], [1], [0, 0, 1, 1], [], []>} : vector<2x32xf32>, vector<32x32xf32>, vector<2x32xf32> -> vector<2x32xf32>
    %c1_13 = arith.constant 1 : index
    %c0_14 = arith.constant 0 : index
    %22 = vector.load %arg2[%c1_13, %c0_14] : memref<8x32xf32, #tpu.memory_space<vmem>>, vector<1x32xf32>
    %23 = vector.broadcast %22 : vector<1x32xf32> to vector<2x32xf32>
    %24 = arith.addf %21, %23 : vector<2x32xf32>
    %cst_15 = arith.constant 0.000000e+00 : f32
    %25 = vector.broadcast %cst_15 : f32 to vector<2x32xf32>
    %26 = arith.maximumf %24, %25 : vector<2x32xf32>
    %c2 = arith.constant 2 : index
    %c0_16 = arith.constant 0 : index
    %c0_17 = arith.constant 0 : index
    %27 = vector.load %arg1[%c2, %c0_16, %c0_17] : memref<8x32x32xf32, #tpu.memory_space<vmem>>, vector<1x32x32xf32>
    %28 = vector.shape_cast %27 : vector<1x32x32xf32> to vector<32x32xf32>
    %cst_18 = arith.constant dense<0.000000e+00> : vector<2x32xf32>
    %29 = tpu.matmul %26, %28, %cst_18 {dimension_numbers = #tpu.dot_dimension_numbers<[1], [0], [0], [1], [0, 0, 1, 1], [], []>} : vector<2x32xf32>, vector<32x32xf32>, vector<2x32xf32> -> vector<2x32xf32>
    %c2_19 = arith.constant 2 : index
    %c0_20 = arith.constant 0 : index
    %30 = vector.load %arg2[%c2_19, %c0_20] : memref<8x32xf32, #tpu.memory_space<vmem>>, vector<1x32xf32>
    %31 = vector.broadcast %30 : vector<1x32xf32> to vector<2x32xf32>
    %32 = arith.addf %29, %31 : vector<2x32xf32>
    %cst_21 = arith.constant 0.000000e+00 : f32
    %33 = vector.broadcast %cst_21 : f32 to vector<2x32xf32>
    %34 = arith.maximumf %32, %33 : vector<2x32xf32>
    %c3 = arith.constant 3 : index
    %c0_22 = arith.constant 0 : index
    %c0_23 = arith.constant 0 : index
    %35 = vector.load %arg1[%c3, %c0_22, %c0_23] : memref<8x32x32xf32, #tpu.memory_space<vmem>>, vector<1x32x32xf32>
    %36 = vector.shape_cast %35 : vector<1x32x32xf32> to vector<32x32xf32>
    %cst_24 = arith.constant dense<0.000000e+00> : vector<2x32xf32>
    %37 = tpu.matmul %34, %36, %cst_24 {dimension_numbers = #tpu.dot_dimension_numbers<[1], [0], [0], [1], [0, 0, 1, 1], [], []>} : vector<2x32xf32>, vector<32x32xf32>, vector<2x32xf32> -> vector<2x32xf32>
    %c3_25 = arith.constant 3 : index
    %c0_26 = arith.constant 0 : index
    %38 = vector.load %arg2[%c3_25, %c0_26] : memref<8x32xf32, #tpu.memory_space<vmem>>, vector<1x32xf32>
    %39 = vector.broadcast %38 : vector<1x32xf32> to vector<2x32xf32>
    %40 = arith.addf %37, %39 : vector<2x32xf32>
    %cst_27 = arith.constant 0.000000e+00 : f32
    %41 = vector.broadcast %cst_27 : f32 to vector<2x32xf32>
    %42 = arith.maximumf %40, %41 : vector<2x32xf32>
    %c4 = arith.constant 4 : index
    %c0_28 = arith.constant 0 : index
    %c0_29 = arith.constant 0 : index
    %43 = vector.load %arg1[%c4, %c0_28, %c0_29] : memref<8x32x32xf32, #tpu.memory_space<vmem>>, vector<1x32x32xf32>
    %44 = vector.shape_cast %43 : vector<1x32x32xf32> to vector<32x32xf32>
    %cst_30 = arith.constant dense<0.000000e+00> : vector<2x32xf32>
    %45 = tpu.matmul %42, %44, %cst_30 {dimension_numbers = #tpu.dot_dimension_numbers<[1], [0], [0], [1], [0, 0, 1, 1], [], []>} : vector<2x32xf32>, vector<32x32xf32>, vector<2x32xf32> -> vector<2x32xf32>
    %c4_31 = arith.constant 4 : index
    %c0_32 = arith.constant 0 : index
    %46 = vector.load %arg2[%c4_31, %c0_32] : memref<8x32xf32, #tpu.memory_space<vmem>>, vector<1x32xf32>
    %47 = vector.broadcast %46 : vector<1x32xf32> to vector<2x32xf32>
    %48 = arith.addf %45, %47 : vector<2x32xf32>
    %cst_33 = arith.constant 0.000000e+00 : f32
    %49 = vector.broadcast %cst_33 : f32 to vector<2x32xf32>
    %50 = arith.maximumf %48, %49 : vector<2x32xf32>
    %c5 = arith.constant 5 : index
    %c0_34 = arith.constant 0 : index
    %c0_35 = arith.constant 0 : index
    %51 = vector.load %arg1[%c5, %c0_34, %c0_35] : memref<8x32x32xf32, #tpu.memory_space<vmem>>, vector<1x32x32xf32>
    %52 = vector.shape_cast %51 : vector<1x32x32xf32> to vector<32x32xf32>
    %cst_36 = arith.constant dense<0.000000e+00> : vector<2x32xf32>
    %53 = tpu.matmul %50, %52, %cst_36 {dimension_numbers = #tpu.dot_dimension_numbers<[1], [0], [0], [1], [0, 0, 1, 1], [], []>} : vector<2x32xf32>, vector<32x32xf32>, vector<2x32xf32> -> vector<2x32xf32>
    %c5_37 = arith.constant 5 : index
    %c0_38 = arith.constant 0 : index
    %54 = vector.load %arg2[%c5_37, %c0_38] : memref<8x32xf32, #tpu.memory_space<vmem>>, vector<1x32xf32>
    %55 = vector.broadcast %54 : vector<1x32xf32> to vector<2x32xf32>
    %56 = arith.addf %53, %55 : vector<2x32xf32>
    %cst_39 = arith.constant 0.000000e+00 : f32
    %57 = vector.broadcast %cst_39 : f32 to vector<2x32xf32>
    %58 = arith.maximumf %56, %57 : vector<2x32xf32>
    %c6 = arith.constant 6 : index
    %c0_40 = arith.constant 0 : index
    %c0_41 = arith.constant 0 : index
    %59 = vector.load %arg1[%c6, %c0_40, %c0_41] : memref<8x32x32xf32, #tpu.memory_space<vmem>>, vector<1x32x32xf32>
    %60 = vector.shape_cast %59 : vector<1x32x32xf32> to vector<32x32xf32>
    %cst_42 = arith.constant dense<0.000000e+00> : vector<2x32xf32>
    %61 = tpu.matmul %58, %60, %cst_42 {dimension_numbers = #tpu.dot_dimension_numbers<[1], [0], [0], [1], [0, 0, 1, 1], [], []>} : vector<2x32xf32>, vector<32x32xf32>, vector<2x32xf32> -> vector<2x32xf32>
    %c6_43 = arith.constant 6 : index
    %c0_44 = arith.constant 0 : index
    %62 = vector.load %arg2[%c6_43, %c0_44] : memref<8x32xf32, #tpu.memory_space<vmem>>, vector<1x32xf32>
    %63 = vector.broadcast %62 : vector<1x32xf32> to vector<2x32xf32>
    %64 = arith.addf %61, %63 : vector<2x32xf32>
    %cst_45 = arith.constant 0.000000e+00 : f32
    %65 = vector.broadcast %cst_45 : f32 to vector<2x32xf32>
    %66 = arith.maximumf %64, %65 : vector<2x32xf32>
    %c7 = arith.constant 7 : index
    %c0_46 = arith.constant 0 : index
    %c0_47 = arith.constant 0 : index
    %67 = vector.load %arg1[%c7, %c0_46, %c0_47] : memref<8x32x32xf32, #tpu.memory_space<vmem>>, vector<1x32x32xf32>
    %68 = vector.shape_cast %67 : vector<1x32x32xf32> to vector<32x32xf32>
    %cst_48 = arith.constant dense<0.000000e+00> : vector<2x32xf32>
    %69 = tpu.matmul %66, %68, %cst_48 {dimension_numbers = #tpu.dot_dimension_numbers<[1], [0], [0], [1], [0, 0, 1, 1], [], []>} : vector<2x32xf32>, vector<32x32xf32>, vector<2x32xf32> -> vector<2x32xf32>
    %c7_49 = arith.constant 7 : index
    %c0_50 = arith.constant 0 : index
    %70 = vector.load %arg2[%c7_49, %c0_50] : memref<8x32xf32, #tpu.memory_space<vmem>>, vector<1x32xf32>
    %71 = vector.broadcast %70 : vector<1x32xf32> to vector<2x32xf32>
    %72 = arith.addf %69, %71 : vector<2x32xf32>
    %c0_51 = arith.constant 0 : index
    %c0_52 = arith.constant 0 : index
    %73 = vector.load %arg3[%c0_51, %c0_52] : memref<2x32xf32, #tpu.memory_space<vmem>>, vector<2x32xf32>
    tpu.vector_store %arg3[%c0_51, %c0_52], %72 {strides = array<i32>} : memref<2x32xf32, #tpu.memory_space<vmem>>, vector<2x32xf32>,
    return
  }
}

</mosaic_0001>

<llo_original>
// kernel: tpu_custom_call.1
$region0: #{tpu_custom_call.1}
  #allocation0 [shape = 'u32[]', space=smem, size = 0x4, offset = 0x4, fixed_abs, tag = 'smem constant byte address 0x4 - core index']
  #allocation1 [shape = 'u32[144,128]{1,0:T(1,128)}', space=vmem, size = 0x12000, scoped, tag = 'internal scratch']
  %s0 = inlined_call_operand.hbm [shape: f32[2,32], index: 0, kind: input, shape index: {}]
  %s1 = inlined_call_operand.hbm [shape: f32[8,32,32], index: 1, kind: input, shape index: {}]
  %s2 = inlined_call_operand.hbm [shape: f32[8,32], index: 2, kind: input, shape index: {}]
  %s3 = inlined_call_operand.hbm [shape: f32[2,32], index: 3, kind: output, shape index: {}]
  %s4 = sld [smem:[#allocation0]]
  $region34: #{tpu_custom_call.1} parent=0
    _
  %s6 = ssub.s32 1, %s4
  %s7 = scalar_select 0, %s6, %s4
  $region1: #{tpu_custom_call.1} parent=0
    #allocation2 [shape = 'u8[1024]{0}', space=vmem, size = 0x400, scoped, tag = 'input window, operand 0, single buffered']
    #allocation3 [shape = 's32[1]{0}', space=sflag, size = 0x4, scoped, tag = 'scoped memory for tpu_custom_call.1']
    #allocation4 [shape = 's32[1]{0}', space=sflag, size = 0x4, scoped, tag = 'scoped memory for tpu_custom_call.1']
    #allocation5 [shape = 'u8[131072]{0}', space=vmem, size = 0x20000, scoped, tag = 'input window, operand 1, single buffered']
    #allocation6 [shape = 's32[1]{0}', space=sflag, size = 0x4, scoped, tag = 'scoped memory for tpu_custom_call.1']
    #allocation7 [shape = 'u8[4096]{0}', space=vmem, size = 0x1000, scoped, tag = 'input window, operand 2, single buffered']
    #allocation8 [shape = 'u8[1024]{0}', space=vmem, size = 0x400, scoped, tag = 'output window, operand 0, single buffered']
    %8 = vsyncpa [#allocation3], 0
    %9 = vsyncpa [#allocation6], 0
    %10 = vsyncpa [#allocation4], 0
    // Predicated region
    $region2: #{tpu_custom_call.1} parent=1 // pred_check
      _
    $region3: #{tpu_custom_call.1} parent=1 // pred_check_branch
      %12 = sbr.rel (0) target = $region5
    $region4: #{tpu_custom_call.1} parent=1 // pred_region
      %s14 = ssub.s32 32, 32
      %15 = vsyncadd [#allocation3], %s14
      %s17 = sshll.u32 [#allocation2], 4
      %s18 = int_to_ptr.vmem [resolvable:$true] %s17
      %20 = dma.hbm_to_vmem [thread:$0]  %s0, 32, %s18, [#allocation3]
    $region5: #{tpu_custom_call.1} parent=1 // pred_fallthru
      _
    // Predicated region
    $region6: #{tpu_custom_call.1} parent=1 // pred_check
      _
    $region7: #{tpu_custom_call.1} parent=1 // pred_check_branch
      %22 = sbr.rel (0) target = $region9
    $region8: #{tpu_custom_call.1} parent=1 // pred_region
      %s24 = ssub.s32 4096, 4096
      %25 = vsyncadd [#allocation6], %s24
      %s26 = sshll.u32 [#allocation5], 4
      %s27 = int_to_ptr.vmem [resolvable:$true] %s26
      %32 = dma.hbm_to_vmem [thread:$0]  %s1, 4096, %s27, [#allocation6], 128, 128, 8
    $region9: #{tpu_custom_call.1} parent=1 // pred_fallthru
      _
    // Predicated region
    $region10: #{tpu_custom_call.1} parent=1 // pred_check
      _
    $region11: #{tpu_custom_call.1} parent=1 // pred_check_branch
      %34 = sbr.rel (0) target = $region13
    $region12: #{tpu_custom_call.1} parent=1 // pred_region
      %s36 = ssub.s32 128, 128
      %37 = vsyncadd [#allocation6], %s36
      %s39 = sshll.u32 [#allocation7], 4
      %s40 = int_to_ptr.vmem [resolvable:$true] %s39
      %42 = dma.hbm_to_vmem [thread:$0]  %s2, 128, %s40, [#allocation6]
    $region13: #{tpu_custom_call.1} parent=1 // pred_fallthru
      _
    // Predicated region
    $region14: #{tpu_custom_call.1} parent=1 // pred_check
      _
    $region15: #{tpu_custom_call.1} parent=1 // pred_check_branch
      %44 = sbr.rel (0) target = $region17
    $region16: #{tpu_custom_call.1} parent=1 // pred_region
      %45 = dma.done [#allocation3], 32
    $region17: #{tpu_custom_call.1} parent=1 // pred_fallthru
      _
    // Predicated region
    $region18: #{tpu_custom_call.1} parent=1 // pred_check
      _
    $region19: #{tpu_custom_call.1} parent=1 // pred_check_branch
      %47 = sbr.rel (0) target = $region21
    $region20: #{tpu_custom_call.1} parent=1 // pred_region
      %48 = dma.done [#allocation6], 4096
    $region21: #{tpu_custom_call.1} parent=1 // pred_fallthru
      _
    // Predicated region
    $region22: #{tpu_custom_call.1} parent=1 // pred_check
      _
    $region23: #{tpu_custom_call.1} parent=1 // pred_check_branch
      %50 = sbr.rel (0) target = $region25
    $region24: #{tpu_custom_call.1} parent=1 // pred_region
      %51 = dma.done [#allocation6], 128
    $region25: #{tpu_custom_call.1} parent=1 // pred_fallthru
      _
    %v52 = vld [vmem:[#allocation2] sm:$0x3]
    %v53 = vmul.f32 %v52, %v52
    %vm54 = vcmask 254976
    %v55 = vsel %vm54, %v53, 0.0
    %56 = vadd.xlane.f32.xlu0 %v55
    %v57 = vpop.xlane.xlu0 %56
    %v58 = vrcp.pop 32.0
    %v59 = vmul.f32 %v57, %v58
    %v60 = vadd.f32 %v59, 1e-08
    %v61 = vrsqrt.pop %v60
    %v62 = vmul.f32 %v52, %v61
    %v63 = vld [vmem:[#allocation5] sm:$0xff]
    %v64 = vld [vmem:[#allocation5 + $0x8] sm:$0xff]
    %v65 = vld [vmem:[#allocation5 + $0x10] sm:$0xff]
    %v66 = vld [vmem:[#allocation5 + $0x18] sm:$0xff]
    %v67 = vld [vmem:[#allocation7] sm:$0x1]
    %v68 = vlaneseq
    %v69 = vshrl.u32 %v68, 7
    %v70 = vsub.s32 0, %v69
    %v71 = vrot.slane %v67, %v70
    %vm72 = vcmask 261120
    %v74 = vsel %vm72, %v62, 0
    %76 = vmatprep.subr.mxu0 0.0
    %77 = vmatpush1.msra.mxu0 %v63
    %78 = vmatprep.subr.mxu0 0.0
    %79 = vmatpush1.msra.mxu0 %v64
    %80 = vmatprep.subr.mxu0 0.0
    %81 = vmatpush1.msra.mxu0 %v65
    %82 = vmatprep.subr.mxu0 0.0
    %83 = vmatpush1.msra.mxu0 %v66
    %84 = vmatprep.subr.mxu0 0.0
    %85 = vmatpush1.msra.mxu0 0.0
    %86 = vmatprep.subr.mxu0 0.0
    %87 = vmatpush1.msra.mxu0 0.0
    %88 = vmatprep.subr.mxu0 0.0
    %89 = vmatpush1.msra.mxu0 0.0
    %90 = vmatprep.subr.mxu0 0.0
    %91 = vmatpush1.msra.mxu0 0.0
    %92 = vmatprep.subr.mxu0 0.0
    %93 = vmatpush1.msra.mxu0 0.0
    %94 = vmatprep.subr.mxu0 0.0
    %95 = vmatpush1.msra.mxu0 0.0
    %96 = vmatprep.subr.mxu0 0.0
    %97 = vmatpush1.msra.mxu0 0.0
    %98 = vmatprep.subr.mxu0 0.0
    %99 = vmatpush1.msra.mxu0 0.0
    %100 = vmatprep.subr.mxu0 0.0
    %101 = vmatpush1.msra.mxu0 0.0
    %102 = vmatprep.subr.mxu0 0.0
    %103 = vmatpush1.msra.mxu0 0.0
    %104 = vmatprep.subr.mxu0 0.0
    %105 = vmatpush1.msra.mxu0 0.0
    %106 = vmatprep.subr.mxu0 0.0
    %107 = vmatpush1.msra.mxu0 0.0
    %108 = vmatprep.subr.mxu0 0.0
    %109 = vmatpush1.msra.mxu0 0.0
    %110 = vmatprep.subr.mxu0 0.0
    %111 = vmatpush1.msra.mxu0 0.0
    %112 = vmatprep.subr.mxu0 0.0
    %113 = vmatpush1.msra.mxu0 0.0
    %114 = vmatprep.subr.mxu0 0.0
    %115 = vmatpush1.msra.mxu0 0.0
    %116 = vmatprep.subr.mxu0 0.0
    %117 = vmatpush1.msra.mxu0 0.0
    %118 = vmatprep.subr.mxu0 0.0
    %119 = vmatpush1.msra.mxu0 0.0
    %120 = vmatprep.subr.mxu0 0.0
    %121 = vmatpush1.msra.mxu0 0.0
    %122 = vmatprep.subr.mxu0 0.0
    %123 = vmatpush1.msra.mxu0 0.0
    %124 = vmatprep.subr.mxu0 0.0
    %125 = vmatpush1.msra.mxu0 0.0
    %126 = vmatprep.subr.mxu0 0.0
    %127 = vmatpush1.msra.mxu0 0.0
    %128 = vmatprep.subr.mxu0 0.0
    %129 = vmatpush1.msra.mxu0 0.0
    %130 = vmatprep.subr.mxu0 0.0
    %131 = vmatpush1.msra.mxu0 0.0
    %132 = vmatprep.subr.mxu0 0.0
    %133 = vmatpush1.msra.mxu0 0.0
    %134 = vmatprep.subr.mxu0 0.0
    %135 = vmatpush1.msra.mxu0 0.0
    %136 = vmatprep.subr.mxu0 0.0
    %137 = vmatpush1.msra.mxu0 0.0
    %138 = vmatprep.subr.mxu0 0.0
    %139 = vmatpush1.msra.mxu0 0.0
    %140 = vmatprep.mubr.f32.mxu0 0.0
    %141 = vmatmul.mubr.f32.gmra.mrb[0].mxu0 %v74
    %v142 = vpop.f32.mrb[0].mxu0
    %v143 = vadd.f32 %v71, %v142
    %v144 = vpop.f32.mrb[0].mxu0
    %145 = vdwg.mxu0
    %v146 = vmax.f32 %v143, 0.0
    %s147 = scalar_lea.vmem [#allocation5], 32
    %v148 = vld [vmem:[%s147] sm:$0xff]
    %v149 = vld [vmem:[%s147 + $0x8] sm:$0xff]
    %v150 = vld [vmem:[%s147 + $0x10] sm:$0xff]
    %v151 = vld [vmem:[%s147 + $0x18] sm:$0xff]
    %v152 = vld [vmem:[#allocation7 + $0x1] sm:$0x1]
    %v153 = vlaneseq
    %v154 = vshrl.u32 %v153, 7
    %v155 = vsub.s32 0, %v154
    %v156 = vrot.slane %v152, %v155
    %v158 = vsel %vm72, %v146, 0
    %160 = vmatprep.subr.mxu0 0.0
    %161 = vmatpush1.msra.mxu0 %v148
    %162 = vmatprep.subr.mxu0 0.0
    %163 = vmatpush1.msra.mxu0 %v149
    %164 = vmatprep.subr.mxu0 0.0
    %165 = vmatpush1.msra.mxu0 %v150
    %166 = vmatprep.subr.mxu0 0.0
    %167 = vmatpush1.msra.mxu0 %v151
    %168 = vmatprep.subr.mxu0 0.0
    %169 = vmatpush1.msra.mxu0 0.0
    %170 = vmatprep.subr.mxu0 0.0
    %171 = vmatpush1.msra.mxu0 0.0
    %172 = vmatprep.subr.mxu0 0.0
    %173 = vmatpush1.msra.mxu0 0.0
    %174 = vmatprep.subr.mxu0 0.0
    %175 = vmatpush1.msra.mxu0 0.0
    %176 = vmatprep.subr.mxu0 0.0
    %177 = vmatpush1.msra.mxu0 0.0
    %178 = vmatprep.subr.mxu0 0.0
    %179 = vmatpush1.msra.mxu0 0.0
    %180 = vmatprep.subr.mxu0 0.0
    %181 = vmatpush1.msra.mxu0 0.0
    %182 = vmatprep.subr.mxu0 0.0
    %183 = vmatpush1.msra.mxu0 0.0
    %184 = vmatprep.subr.mxu0 0.0
    %185 = vmatpush1.msra.mxu0 0.0
    %186 = vmatprep.subr.mxu0 0.0
    %187 = vmatpush1.msra.mxu0 0.0
    %188 = vmatprep.subr.mxu0 0.0
    %189 = vmatpush1.msra.mxu0 0.0
    %190 = vmatprep.subr.mxu0 0.0
    %191 = vmatpush1.msra.mxu0 0.0
    %192 = vmatprep.subr.mxu0 0.0
    %193 = vmatpush1.msra.mxu0 0.0
    %194 = vmatprep.subr.mxu0 0.0
    %195 = vmatpush1.msra.mxu0 0.0
    %196 = vmatprep.subr.mxu0 0.0
    %197 = vmatpush1.msra.mxu0 0.0
    %198 = vmatprep.subr.mxu0 0.0
    %199 = vmatpush1.msra.mxu0 0.0
    %200 = vmatprep.subr.mxu0 0.0
    %201 = vmatpush1.msra.mxu0 0.0
    %202 = vmatprep.subr.mxu0 0.0
    %203 = vmatpush1.msra.mxu0 0.0
    %204 = vmatprep.subr.mxu0 0.0
    %205 = vmatpush1.msra.mxu0 0.0
    %206 = vmatprep.subr.mxu0 0.0
    %207 = vmatpush1.msra.mxu0 0.0
    %208 = vmatprep.subr.mxu0 0.0
    %209 = vmatpush1.msra.mxu0 0.0
    %210 = vmatprep.subr.mxu0 0.0
    %211 = vmatpush1.msra.mxu0 0.0
    %212 = vmatprep.subr.mxu0 0.0
    %213 = vmatpush1.msra.mxu0 0.0
    %214 = vmatprep.subr.mxu0 0.0
    %215 = vmatpush1.msra.mxu0 0.0
    %216 = vmatprep.subr.mxu0 0.0
    %217 = vmatpush1.msra.mxu0 0.0
    %218 = vmatprep.subr.mxu0 0.0
    %219 = vmatpush1.msra.mxu0 0.0
    %220 = vmatprep.subr.mxu0 0.0
    %221 = vmatpush1.msra.mxu0 0.0
    %222 = vmatprep.subr.mxu0 0.0
    %223 = vmatpush1.msra.mxu0 0.0
    %224 = vmatprep.mubr.f32.mxu0 0.0
    %225 = vmatmul.mubr.f32.gmra.mrb[0].mxu0 %v158
    %v226 = vpop.f32.mrb[0].mxu0
    %v227 = vadd.f32 %v156, %v226
    %v228 = vpop.f32.mrb[0].mxu0
    %229 = vdwg.mxu0
    %v230 = vmax.f32 %v227, 0.0
    %s231 = scalar_lea.vmem [#allocation5], 64
    %v232 = vld [vmem:[%s231] sm:$0xff]
    %v233 = vld [vmem:[%s231 + $0x8] sm:$0xff]
    %v234 = vld [vmem:[%s231 + $0x10] sm:$0xff]
    %v235 = vld [vmem:[%s231 + $0x18] sm:$0xff]
    %v236 = vld [vmem:[#allocation7 + $0x2] sm:$0x1]
    %v237 = vlaneseq
    %v238 = vshrl.u32 %v237, 7
    %v239 = vsub.s32 0, %v238
    %v240 = vrot.slane %v236, %v239
    %v242 = vsel %vm72, %v230, 0
    %244 = vmatprep.subr.mxu0 0.0
    %245 = vmatpush1.msra.mxu0 %v232
    %246 = vmatprep.subr.mxu0 0.0
    %247 = vmatpush1.msra.mxu0 %v233
    %248 = vmatprep.subr.mxu0 0.0
    %249 = vmatpush1.msra.mxu0 %v234
    %250 = vmatprep.subr.mxu0 0.0
    %251 = vmatpush1.msra.mxu0 %v235
    %252 = vmatprep.subr.mxu0 0.0
    %253 = vmatpush1.msra.mxu0 0.0
    %254 = vmatprep.subr.mxu0 0.0
    %255 = vmatpush1.msra.mxu0 0.0
    %256 = vmatprep.subr.mxu0 0.0
    %257 = vmatpush1.msra.mxu0 0.0
    %258 = vmatprep.subr.mxu0 0.0
    %259 = vmatpush1.msra.mxu0 0.0
    %260 = vmatprep.subr.mxu0 0.0
    %261 = vmatpush1.msra.mxu0 0.0
    %262 = vmatprep.subr.mxu0 0.0
    %263 = vmatpush1.msra.mxu0 0.0
    %264 = vmatprep.subr.mxu0 0.0
    %265 = vmatpush1.msra.mxu0 0.0
    %266 = vmatprep.subr.mxu0 0.0
    %267 = vmatpush1.msra.mxu0 0.0
    %268 = vmatprep.subr.mxu0 0.0
    %269 = vmatpush1.msra.mxu0 0.0
    %270 = vmatprep.subr.mxu0 0.0
    %271 = vmatpush1.msra.mxu0 0.0
    %272 = vmatprep.subr.mxu0 0.0
    %273 = vmatpush1.msra.mxu0 0.0
    %274 = vmatprep.subr.mxu0 0.0
    %275 = vmatpush1.msra.mxu0 0.0
    %276 = vmatprep.subr.mxu0 0.0
    %277 = vmatpush1.msra.mxu0 0.0
    %278 = vmatprep.subr.mxu0 0.0
    %279 = vmatpush1.msra.mxu0 0.0
    %280 = vmatprep.subr.mxu0 0.0
    %281 = vmatpush1.msra.mxu0 0.0
    %282 = vmatprep.subr.mxu0 0.0
    %283 = vmatpush1.msra.mxu0 0.0
    %284 = vmatprep.subr.mxu0 0.0
    %285 = vmatpush1.msra.mxu0 0.0
    %286 = vmatprep.subr.mxu0 0.0
    %287 = vmatpush1.msra.mxu0 0.0
    %288 = vmatprep.subr.mxu0 0.0
    %289 = vmatpush1.msra.mxu0 0.0
    %290 = vmatprep.subr.mxu0 0.0
    %291 = vmatpush1.msra.mxu0 0.0
    %292 = vmatprep.subr.mxu0 0.0
    %293 = vmatpush1.msra.mxu0 0.0
    %294 = vmatprep.subr.mxu0 0.0
    %295 = vmatpush1.msra.mxu0 0.0
    %296 = vmatprep.subr.mxu0 0.0
    %297 = vmatpush1.msra.mxu0 0.0
    %298 = vmatprep.subr.mxu0 0.0
    %299 = vmatpush1.msra.mxu0 0.0
    %300 = vmatprep.subr.mxu0 0.0
    %301 = vmatpush1.msra.mxu0 0.0
    %302 = vmatprep.subr.mxu0 0.0
    %303 = vmatpush1.msra.mxu0 0.0
    %304 = vmatprep.subr.mxu0 0.0
    %305 = vmatpush1.msra.mxu0 0.0
    %306 = vmatprep.subr.mxu0 0.0
    %307 = vmatpush1.msra.mxu0 0.0
    %308 = vmatprep.mubr.f32.mxu0 0.0
    %309 = vmatmul.mubr.f32.gmra.mrb[0].mxu0 %v242
    %v310 = vpop.f32.mrb[0].mxu0
    %v311 = vadd.f32 %v240, %v310
    %v312 = vpop.f32.mrb[0].mxu0
    %313 = vdwg.mxu0
    %v314 = vmax.f32 %v311, 0.0
    %s315 = scalar_lea.vmem [#allocation5], 96
    %v316 = vld [vmem:[%s315] sm:$0xff]
    %v317 = vld [vmem:[%s315 + $0x8] sm:$0xff]
    %v318 = vld [vmem:[%s315 + $0x10] sm:$0xff]
    %v319 = vld [vmem:[%s315 + $0x18] sm:$0xff]
    %v320 = vld [vmem:[#allocation7 + $0x3] sm:$0x1]
    %v321 = vlaneseq
    %v322 = vshrl.u32 %v321, 7
    %v323 = vsub.s32 0, %v322
    %v324 = vrot.slane %v320, %v323
    %v326 = vsel %vm72, %v314, 0
    %328 = vmatprep.subr.mxu0 0.0
    %329 = vmatpush1.msra.mxu0 %v316
    %330 = vmatprep.subr.mxu0 0.0
    %331 = vmatpush1.msra.mxu0 %v317
    %332 = vmatprep.subr.mxu0 0.0
    %333 = vmatpush1.msra.mxu0 %v318
    %334 = vmatprep.subr.mxu0 0.0
    %335 = vmatpush1.msra.mxu0 %v319
    %336 = vmatprep.subr.mxu0 0.0
    %337 = vmatpush1.msra.mxu0 0.0
    %338 = vmatprep.subr.mxu0 0.0
    %339 = vmatpush1.msra.mxu0 0.0
    %340 = vmatprep.subr.mxu0 0.0
    %341 = vmatpush1.msra.mxu0 0.0
    %342 = vmatprep.subr.mxu0 0.0
    %343 = vmatpush1.msra.mxu0 0.0
    %344 = vmatprep.subr.mxu0 0.0
    %345 = vmatpush1.msra.mxu0 0.0
    %346 = vmatprep.subr.mxu0 0.0
    %347 = vmatpush1.msra.mxu0 0.0
    %348 = vmatprep.subr.mxu0 0.0
    %349 = vmatpush1.msra.mxu0 0.0
    %350 = vmatprep.subr.mxu0 0.0
    %351 = vmatpush1.msra.mxu0 0.0
    %352 = vmatprep.subr.mxu0 0.0
    %353 = vmatpush1.msra.mxu0 0.0
    %354 = vmatprep.subr.mxu0 0.0
    %355 = vmatpush1.msra.mxu0 0.0
    %356 = vmatprep.subr.mxu0 0.0
    %357 = vmatpush1.msra.mxu0 0.0
    %358 = vmatprep.subr.mxu0 0.0
    %359 = vmatpush1.msra.mxu0 0.0
    %360 = vmatprep.subr.mxu0 0.0
    %361 = vmatpush1.msra.mxu0 0.0
    %362 = vmatprep.subr.mxu0 0.0
    %363 = vmatpush1.msra.mxu0 0.0
    %364 = vmatprep.subr.mxu0 0.0
    %365 = vmatpush1.msra.mxu0 0.0
    %366 = vmatprep.subr.mxu0 0.0
    %367 = vmatpush1.msra.mxu0 0.0
    %368 = vmatprep.subr.mxu0 0.0
    %369 = vmatpush1.msra.mxu0 0.0
    %370 = vmatprep.subr.mxu0 0.0
    %371 = vmatpush1.msra.mxu0 0.0
    %372 = vmatprep.subr.mxu0 0.0
    %373 = vmatpush1.msra.mxu0 0.0
    %374 = vmatprep.subr.mxu0 0.0
    %375 = vmatpush1.msra.mxu0 0.0
    %376 = vmatprep.subr.mxu0 0.0
    %377 = vmatpush1.msra.mxu0 0.0
    %378 = vmatprep.subr.mxu0 0.0
    %379 = vmatpush1.msra.mxu0 0.0
    %380 = vmatprep.subr.mxu0 0.0
    %381 = vmatpush1.msra.mxu0 0.0
    %382 = vmatprep.subr.mxu0 0.0
    %383 = vmatpush1.msra.mxu0 0.0
    %384 = vmatprep.subr.mxu0 0.0
    %385 = vmatpush1.msra.mxu0 0.0
    %386 = vmatprep.subr.mxu0 0.0
    %387 = vmatpush1.msra.mxu0 0.0
    %388 = vmatprep.subr.mxu0 0.0
    %389 = vmatpush1.msra.mxu0 0.0
    %390 = vmatprep.subr.mxu0 0.0
    %391 = vmatpush1.msra.mxu0 0.0
    %392 = vmatprep.mubr.f32.mxu0 0.0
    %393 = vmatmul.mubr.f32.gmra.mrb[0].mxu0 %v326
    %v394 = vpop.f32.mrb[0].mxu0
    %v395 = vadd.f32 %v324, %v394
    %v396 = vpop.f32.mrb[0].mxu0
    %397 = vdwg.mxu0
    %v398 = vmax.f32 %v395, 0.0
    %s399 = scalar_lea.vmem [#allocation5], 128
    %v400 = vld [vmem:[%s399] sm:$0xff]
    %v401 = vld [vmem:[%s399 + $0x8] sm:$0xff]
    %v402 = vld [vmem:[%s399 + $0x10] sm:$0xff]
    %v403 = vld [vmem:[%s399 + $0x18] sm:$0xff]
    %v404 = vld [vmem:[#allocation7 + $0x4] sm:$0x1]
    %v405 = vlaneseq
    %v406 = vshrl.u32 %v405, 7
    %v407 = vsub.s32 0, %v406
    %v408 = vrot.slane %v404, %v407
    %v410 = vsel %vm72, %v398, 0
    %412 = vmatprep.subr.mxu0 0.0
    %413 = vmatpush1.msra.mxu0 %v400
    %414 = vmatprep.subr.mxu0 0.0
    %415 = vmatpush1.msra.mxu0 %v401
    %416 = vmatprep.subr.mxu0 0.0
    %417 = vmatpush1.msra.mxu0 %v402
    %418 = vmatprep.subr.mxu0 0.0
    %419 = vmatpush1.msra.mxu0 %v403
    %420 = vmatprep.subr.mxu0 0.0
    %421 = vmatpush1.msra.mxu0 0.0
    %422 = vmatprep.subr.mxu0 0.0
    %423 = vmatpush1.msra.mxu0 0.0
    %424 = vmatprep.subr.mxu0 0.0
    %425 = vmatpush1.msra.mxu0 0.0
    %426 = vmatprep.subr.mxu0 0.0
    %427 = vmatpush1.msra.mxu0 0.0
    %428 = vmatprep.subr.mxu0 0.0
    %429 = vmatpush1.msra.mxu0 0.0
    %430 = vmatprep.subr.mxu0 0.0
    %431 = vmatpush1.msra.mxu0 0.0
    %432 = vmatprep.subr.mxu0 0.0
    %433 = vmatpush1.msra.mxu0 0.0
    %434 = vmatprep.subr.mxu0 0.0
    %435 = vmatpush1.msra.mxu0 0.0
    %436 = vmatprep.subr.mxu0 0.0
    %437 = vmatpush1.msra.mxu0 0.0
    %438 = vmatprep.subr.mxu0 0.0
    %439 = vmatpush1.msra.mxu0 0.0
    %440 = vmatprep.subr.mxu0 0.0
    %441 = vmatpush1.msra.mxu0 0.0
    %442 = vmatprep.subr.mxu0 0.0
    %443 = vmatpush1.msra.mxu0 0.0
    %444 = vmatprep.subr.mxu0 0.0
    %445 = vmatpush1.msra.mxu0 0.0
    %446 = vmatprep.subr.mxu0 0.0
    %447 = vmatpush1.msra.mxu0 0.0
    %448 = vmatprep.subr.mxu0 0.0
    %449 = vmatpush1.msra.mxu0 0.0
    %450 = vmatprep.subr.mxu0 0.0
    %451 = vmatpush1.msra.mxu0 0.0
    %452 = vmatprep.subr.mxu0 0.0
    %453 = vmatpush1.msra.mxu0 0.0
    %454 = vmatprep.subr.mxu0 0.0
    %455 = vmatpush1.msra.mxu0 0.0
    %456 = vmatprep.subr.mxu0 0.0
    %457 = vmatpush1.msra.mxu0 0.0
    %458 = vmatprep.subr.mxu0 0.0
    %459 = vmatpush1.msra.mxu0 0.0
    %460 = vmatprep.subr.mxu0 0.0
    %461 = vmatpush1.msra.mxu0 0.0
    %462 = vmatprep.subr.mxu0 0.0
    %463 = vmatpush1.msra.mxu0 0.0
    %464 = vmatprep.subr.mxu0 0.0
    %465 = vmatpush1.msra.mxu0 0.0
    %466 = vmatprep.subr.mxu0 0.0
    %467 = vmatpush1.msra.mxu0 0.0
    %468 = vmatprep.subr.mxu0 0.0
    %469 = vmatpush1.msra.mxu0 0.0
    %470 = vmatprep.subr.mxu0 0.0
    %471 = vmatpush1.msra.mxu0 0.0
    %472 = vmatprep.subr.mxu0 0.0
    %473 = vmatpush1.msra.mxu0 0.0
    %474 = vmatprep.subr.mxu0 0.0
    %475 = vmatpush1.msra.mxu0 0.0
    %476 = vmatprep.mubr.f32.mxu0 0.0
    %477 = vmatmul.mubr.f32.gmra.mrb[0].mxu0 %v410
    %v478 = vpop.f32.mrb[0].mxu0
    %v479 = vadd.f32 %v408, %v478
    %v480 = vpop.f32.mrb[0].mxu0
    %481 = vdwg.mxu0
    %v482 = vmax.f32 %v479, 0.0
    %s483 = scalar_lea.vmem [#allocation5], 160
    %v484 = vld [vmem:[%s483] sm:$0xff]
    %v485 = vld [vmem:[%s483 + $0x8] sm:$0xff]
    %v486 = vld [vmem:[%s483 + $0x10] sm:$0xff]
    %v487 = vld [vmem:[%s483 + $0x18] sm:$0xff]
    %v488 = vld [vmem:[#allocation7 + $0x5] sm:$0x1]
    %v489 = vlaneseq
    %v490 = vshrl.u32 %v489, 7
    %v491 = vsub.s32 0, %v490
    %v492 = vrot.slane %v488, %v491
    %v494 = vsel %vm72, %v482, 0
    %496 = vmatprep.subr.mxu0 0.0
    %497 = vmatpush1.msra.mxu0 %v484
    %498 = vmatprep.subr.mxu0 0.0
    %499 = vmatpush1.msra.mxu0 %v485
    %500 = vmatprep.subr.mxu0 0.0
    %501 = vmatpush1.msra.mxu0 %v486
    %502 = vmatprep.subr.mxu0 0.0
    %503 = vmatpush1.msra.mxu0 %v487
    %504 = vmatprep.subr.mxu0 0.0
    %505 = vmatpush1.msra.mxu0 0.0
    %506 = vmatprep.subr.mxu0 0.0
    %507 = vmatpush1.msra.mxu0 0.0
    %508 = vmatprep.subr.mxu0 0.0
    %509 = vmatpush1.msra.mxu0 0.0
    %510 = vmatprep.subr.mxu0 0.0
    %511 = vmatpush1.msra.mxu0 0.0
    %512 = vmatprep.subr.mxu0 0.0
    %513 = vmatpush1.msra.mxu0 0.0
    %514 = vmatprep.subr.mxu0 0.0
    %515 = vmatpush1.msra.mxu0 0.0
    %516 = vmatprep.subr.mxu0 0.0
    %517 = vmatpush1.msra.mxu0 0.0
    %518 = vmatprep.subr.mxu0 0.0
    %519 = vmatpush1.msra.mxu0 0.0
    %520 = vmatprep.subr.mxu0 0.0
    %521 = vmatpush1.msra.mxu0 0.0
    %522 = vmatprep.subr.mxu0 0.0
    %523 = vmatpush1.msra.mxu0 0.0
    %524 = vmatprep.subr.mxu0 0.0
    %525 = vmatpush1.msra.mxu0 0.0
    %526 = vmatprep.subr.mxu0 0.0
    %527 = vmatpush1.msra.mxu0 0.0
    %528 = vmatprep.subr.mxu0 0.0
    %529 = vmatpush1.msra.mxu0 0.0
    %530 = vmatprep.subr.mxu0 0.0
    %531 = vmatpush1.msra.mxu0 0.0
    %532 = vmatprep.subr.mxu0 0.0
    %533 = vmatpush1.msra.mxu0 0.0
    %534 = vmatprep.subr.mxu0 0.0
    %535 = vmatpush1.msra.mxu0 0.0
    %536 = vmatprep.subr.mxu0 0.0
    %537 = vmatpush1.msra.mxu0 0.0
    %538 = vmatprep.subr.mxu0 0.0
    %539 = vmatpush1.msra.mxu0 0.0
    %540 = vmatprep.subr.mxu0 0.0
    %541 = vmatpush1.msra.mxu0 0.0
    %542 = vmatprep.subr.mxu0 0.0
    %543 = vmatpush1.msra.mxu0 0.0
    %544 = vmatprep.subr.mxu0 0.0
    %545 = vmatpush1.msra.mxu0 0.0
    %546 = vmatprep.subr.mxu0 0.0
    %547 = vmatpush1.msra.mxu0 0.0
    %548 = vmatprep.subr.mxu0 0.0
    %549 = vmatpush1.msra.mxu0 0.0
    %550 = vmatprep.subr.mxu0 0.0
    %551 = vmatpush1.msra.mxu0 0.0
    %552 = vmatprep.subr.mxu0 0.0
    %553 = vmatpush1.msra.mxu0 0.0
    %554 = vmatprep.subr.mxu0 0.0
    %555 = vmatpush1.msra.mxu0 0.0
    %556 = vmatprep.subr.mxu0 0.0
    %557 = vmatpush1.msra.mxu0 0.0
    %558 = vmatprep.subr.mxu0 0.0
    %559 = vmatpush1.msra.mxu0 0.0
    %560 = vmatprep.mubr.f32.mxu0 0.0
    %561 = vmatmul.mubr.f32.gmra.mrb[0].mxu0 %v494
    %v562 = vpop.f32.mrb[0].mxu0
    %v563 = vadd.f32 %v492, %v562
    %v564 = vpop.f32.mrb[0].mxu0
    %565 = vdwg.mxu0
    %v566 = vmax.f32 %v563, 0.0
    %s567 = scalar_lea.vmem [#allocation5], 192
    %v568 = vld [vmem:[%s567] sm:$0xff]
    %v569 = vld [vmem:[%s567 + $0x8] sm:$0xff]
    %v570 = vld [vmem:[%s567 + $0x10] sm:$0xff]
    %v571 = vld [vmem:[%s567 + $0x18] sm:$0xff]
    %v572 = vld [vmem:[#allocation7 + $0x6] sm:$0x1]
    %v573 = vlaneseq
    %v574 = vshrl.u32 %v573, 7
    %v575 = vsub.s32 0, %v574
    %v576 = vrot.slane %v572, %v575
    %v578 = vsel %vm72, %v566, 0
    %580 = vmatprep.subr.mxu0 0.0
    %581 = vmatpush1.msra.mxu0 %v568
    %582 = vmatprep.subr.mxu0 0.0
    %583 = vmatpush1.msra.mxu0 %v569
    %584 = vmatprep.subr.mxu0 0.0
    %585 = vmatpush1.msra.mxu0 %v570
    %586 = vmatprep.subr.mxu0 0.0
    %587 = vmatpush1.msra.mxu0 %v571
    %588 = vmatprep.subr.mxu0 0.0
    %589 = vmatpush1.msra.mxu0 0.0
    %590 = vmatprep.subr.mxu0 0.0
    %591 = vmatpush1.msra.mxu0 0.0
    %592 = vmatprep.subr.mxu0 0.0
    %593 = vmatpush1.msra.mxu0 0.0
    %594 = vmatprep.subr.mxu0 0.0
    %595 = vmatpush1.msra.mxu0 0.0
    %596 = vmatprep.subr.mxu0 0.0
    %597 = vmatpush1.msra.mxu0 0.0
    %598 = vmatprep.subr.mxu0 0.0
    %599 = vmatpush1.msra.mxu0 0.0
    %600 = vmatprep.subr.mxu0 0.0
    %601 = vmatpush1.msra.mxu0 0.0
    %602 = vmatprep.subr.mxu0 0.0
    %603 = vmatpush1.msra.mxu0 0.0
    %604 = vmatprep.subr.mxu0 0.0
    %605 = vmatpush1.msra.mxu0 0.0
    %606 = vmatprep.subr.mxu0 0.0
    %607 = vmatpush1.msra.mxu0 0.0
    %608 = vmatprep.subr.mxu0 0.0
    %609 = vmatpush1.msra.mxu0 0.0
    %610 = vmatprep.subr.mxu0 0.0
    %611 = vmatpush1.msra.mxu0 0.0
    %612 = vmatprep.subr.mxu0 0.0
    %613 = vmatpush1.msra.mxu0 0.0
    %614 = vmatprep.subr.mxu0 0.0
    %615 = vmatpush1.msra.mxu0 0.0
    %616 = vmatprep.subr.mxu0 0.0
    %617 = vmatpush1.msra.mxu0 0.0
    %618 = vmatprep.subr.mxu0 0.0
    %619 = vmatpush1.msra.mxu0 0.0
    %620 = vmatprep.subr.mxu0 0.0
    %621 = vmatpush1.msra.mxu0 0.0
    %622 = vmatprep.subr.mxu0 0.0
    %623 = vmatpush1.msra.mxu0 0.0
    %624 = vmatprep.subr.mxu0 0.0
    %625 = vmatpush1.msra.mxu0 0.0
    %626 = vmatprep.subr.mxu0 0.0
    %627 = vmatpush1.msra.mxu0 0.0
    %628 = vmatprep.subr.mxu0 0.0
    %629 = vmatpush1.msra.mxu0 0.0
    %630 = vmatprep.subr.mxu0 0.0
    %631 = vmatpush1.msra.mxu0 0.0
    %632 = vmatprep.subr.mxu0 0.0
    %633 = vmatpush1.msra.mxu0 0.0
    %634 = vmatprep.subr.mxu0 0.0
    %635 = vmatpush1.msra.mxu0 0.0
    %636 = vmatprep.subr.mxu0 0.0
    %637 = vmatpush1.msra.mxu0 0.0
    %638 = vmatprep.subr.mxu0 0.0
    %639 = vmatpush1.msra.mxu0 0.0
    %640 = vmatprep.subr.mxu0 0.0
    %641 = vmatpush1.msra.mxu0 0.0
    %642 = vmatprep.subr.mxu0 0.0
    %643 = vmatpush1.msra.mxu0 0.0
    %644 = vmatprep.mubr.f32.mxu0 0.0
    %645 = vmatmul.mubr.f32.gmra.mrb[0].mxu0 %v578
    %v646 = vpop.f32.mrb[0].mxu0
    %v647 = vadd.f32 %v576, %v646
    %v648 = vpop.f32.mrb[0].mxu0
    %649 = vdwg.mxu0
    %v650 = vmax.f32 %v647, 0.0
    %s651 = scalar_lea.vmem [#allocation5], 224
    %v652 = vld [vmem:[%s651] sm:$0xff]
    %v653 = vld [vmem:[%s651 + $0x8] sm:$0xff]
    %v654 = vld [vmem:[%s651 + $0x10] sm:$0xff]
    %v655 = vld [vmem:[%s651 + $0x18] sm:$0xff]
    %v656 = vld [vmem:[#allocation7 + $0x7] sm:$0x1]
    %v657 = vlaneseq
    %v658 = vshrl.u32 %v657, 7
    %v659 = vsub.s32 0, %v658
    %v660 = vrot.slane %v656, %v659
    %v662 = vsel %vm72, %v650, 0
    %664 = vmatprep.subr.mxu0 0.0
    %665 = vmatpush1.msra.mxu0 %v652
    %666 = vmatprep.subr.mxu0 0.0
    %667 = vmatpush1.msra.mxu0 %v653
    %668 = vmatprep.subr.mxu0 0.0
    %669 = vmatpush1.msra.mxu0 %v654
    %670 = vmatprep.subr.mxu0 0.0
    %671 = vmatpush1.msra.mxu0 %v655
    %672 = vmatprep.subr.mxu0 0.0
    %673 = vmatpush1.msra.mxu0 0.0
    %674 = vmatprep.subr.mxu0 0.0
    %675 = vmatpush1.msra.mxu0 0.0
    %676 = vmatprep.subr.mxu0 0.0
    %677 = vmatpush1.msra.mxu0 0.0
    %678 = vmatprep.subr.mxu0 0.0
    %679 = vmatpush1.msra.mxu0 0.0
    %680 = vmatprep.subr.mxu0 0.0
    %681 = vmatpush1.msra.mxu0 0.0
    %682 = vmatprep.subr.mxu0 0.0
    %683 = vmatpush1.msra.mxu0 0.0
    %684 = vmatprep.subr.mxu0 0.0
    %685 = vmatpush1.msra.mxu0 0.0
    %686 = vmatprep.subr.mxu0 0.0
    %687 = vmatpush1.msra.mxu0 0.0
    %688 = vmatprep.subr.mxu0 0.0
    %689 = vmatpush1.msra.mxu0 0.0
    %690 = vmatprep.subr.mxu0 0.0
    %691 = vmatpush1.msra.mxu0 0.0
    %692 = vmatprep.subr.mxu0 0.0
    %693 = vmatpush1.msra.mxu0 0.0
    %694 = vmatprep.subr.mxu0 0.0
    %695 = vmatpush1.msra.mxu0 0.0
    %696 = vmatprep.subr.mxu0 0.0
    %697 = vmatpush1.msra.mxu0 0.0
    %698 = vmatprep.subr.mxu0 0.0
    %699 = vmatpush1.msra.mxu0 0.0
    %700 = vmatprep.subr.mxu0 0.0
    %701 = vmatpush1.msra.mxu0 0.0
    %702 = vmatprep.subr.mxu0 0.0
    %703 = vmatpush1.msra.mxu0 0.0
    %704 = vmatprep.subr.mxu0 0.0
    %705 = vmatpush1.msra.mxu0 0.0
    %706 = vmatprep.subr.mxu0 0.0
    %707 = vmatpush1.msra.mxu0 0.0
    %708 = vmatprep.subr.mxu0 0.0
    %709 = vmatpush1.msra.mxu0 0.0
    %710 = vmatprep.subr.mxu0 0.0
    %711 = vmatpush1.msra.mxu0 0.0
    %712 = vmatprep.subr.mxu0 0.0
    %713 = vmatpush1.msra.mxu0 0.0
    %714 = vmatprep.subr.mxu0 0.0
    %715 = vmatpush1.msra.mxu0 0.0
    %716 = vmatprep.subr.mxu0 0.0
    %717 = vmatpush1.msra.mxu0 0.0
    %718 = vmatprep.subr.mxu0 0.0
    %719 = vmatpush1.msra.mxu0 0.0
    %720 = vmatprep.subr.mxu0 0.0
    %721 = vmatpush1.msra.mxu0 0.0
    %722 = vmatprep.subr.mxu0 0.0
    %723 = vmatpush1.msra.mxu0 0.0
    %724 = vmatprep.subr.mxu0 0.0
    %725 = vmatpush1.msra.mxu0 0.0
    %726 = vmatprep.subr.mxu0 0.0
    %727 = vmatpush1.msra.mxu0 0.0
    %728 = vmatprep.mubr.f32.mxu0 0.0
    %729 = vmatmul.mubr.f32.gmra.mrb[0].mxu0 %v662
    %v730 = vpop.f32.mrb[0].mxu0
    %v731 = vadd.f32 %v660, %v730
    %v732 = vpop.f32.mrb[0].mxu0
    %733 = vdwg.mxu0
    %734 = vst.msk [vmem:[#allocation8] sm:$0x3] %vm54, %v731
    // Predicated region
    $region26: #{tpu_custom_call.1} parent=1 // pred_check
      _
    $region27: #{tpu_custom_call.1} parent=1 // pred_check_branch
      %736 = sbr.rel (0) target = $region29
    $region28: #{tpu_custom_call.1} parent=1 // pred_region
      %s738 = ssub.s32 32, 32
      %739 = vsyncadd [#allocation4], %s738
      %s741 = sshll.u32 [#allocation8], 4
      %s742 = int_to_ptr.vmem [resolvable:$true] %s741
      %744 = dma.vmem_to_hbm [thread:$0]  %s742, 32, %s3, [#allocation4]
    $region29: #{tpu_custom_call.1} parent=1 // pred_fallthru
      _
    // Predicated region
    $region30: #{tpu_custom_call.1} parent=1 // pred_check
      _
    $region31: #{tpu_custom_call.1} parent=1 // pred_check_branch
      %746 = sbr.rel (0) target = $region33
    $region32: #{tpu_custom_call.1} parent=1 // pred_region
      %747 = dma.done [#allocation4], 32
    $region33: #{tpu_custom_call.1} parent=1 // pred_fallthru
      _
    %748 = vsyncpa [#allocation3], 1
    %749 = vsyncpa [#allocation6], 1
    %750 = vsyncpa [#allocation4], 1

</llo_original>
